<compile_context>
chip_gen: v7x
topology: tpu7x:2x2x1
jax: 0.10.0
libtpu: 0.0.40
codegen_flags: <defaults>
</compile_context>

<pallas_src>
import jax
import jax.numpy as jnp
from jax.experimental import pallas as pl
from jax.experimental.pallas import tpu as pltpu

_HEAD_PAD = 8              # q-head rows padded to one sublane tile
_LANE = 128
_DEFAULT_BATCH_TILE = 2048


def _cdiv(a, b):
    return -(-a // b)


def _round_up(a, m):
    return _cdiv(a, m) * m


def _block_diag(mats):
    """Block-diagonal concat of 2-D f32 matrices (no scipy dependency)."""
    if len(mats) == 1:
        return mats[0]
    rows = []
    for i, m in enumerate(mats):
        row = [m if j == i else jnp.zeros((m.shape[0], o.shape[1]), m.dtype)
               for j, o in enumerate(mats)]
        rows.append(jnp.concatenate(row, axis=1))
    return jnp.concatenate(rows, axis=0)


# --------------------------------------------------------------------------
# Kernel
# --------------------------------------------------------------------------
def _critic_kernel(s_ref, a_ref, w1s_ref, w1a_ref, b1_ref,
                   w2_ref, b2_ref, w3_ref, b3_ref, q_ref):
    """One batch tile of 1..8 fused critics.

    Activations are batch-major (rows = batch) for the two hidden matmuls.
    The q-head contracts the feature axis of BOTH operands (trans-B
    dot_general), so the result lands lane-dense as (heads, batch) and the
    output store is a couple of full-width vst ops.
    """
    cdt = w1s_ref.dtype                      # MXU input dtype (bf16 or f32)

    # fc1 with the torch cat([state, action], 1) fused into two dots:
    #   x @ W1 == state @ W1[:d_s] + action @ W1[d_s:]
    # (the K=4 action dot could also be 4 VPU broadcast-FMAs; kept on the MXU
    #  since it is minor and shares the adjacent state dot's schedule.)
    h1 = jnp.dot(s_ref[...].astype(cdt), w1s_ref[...],
                 preferred_element_type=jnp.float32)
    h1 = h1 + jnp.dot(a_ref[...].astype(cdt), w1a_ref[...],
                      preferred_element_type=jnp.float32)
    h1 = jnp.maximum(h1 + b1_ref[...], 0.0)                  # (tb, fc1t) f32

    # fc2 (block-diagonal when several critics are fused)
    h2 = jnp.dot(h1.astype(cdt), w2_ref[...],
                 preferred_element_type=jnp.float32)
    h2 = jnp.maximum(h2 + b2_ref[...], 0.0)                  # (tb, fc2t) f32

    # q-heads: q[r, b] = sum_f w3[r, f] * h2[b, f]  ->  (8, tb), lane-dense.
    q = jax.lax.dot_general(w3_ref[...], h2,
                            dimension_numbers=(((1,), (1,)), ((), ())),
                            preferred_element_type=jnp.float32)
    q_ref[...] = (q + b3_ref[...]).astype(q_ref.dtype)


# --------------------------------------------------------------------------
# Wrappers
# --------------------------------------------------------------------------
def _tile_plan(batch, batch_tile):
    n_tiles = _cdiv(batch, batch_tile)
    if batch >= 512 and n_tiles == 1:
        # v7x megacore: split large batches so each TensorCore gets one tile.
        n_tiles = 2
    align = _LANE if batch >= _LANE else 8
    tb = _round_up(_cdiv(batch, n_tiles), align)
    return n_tiles, tb, n_tiles * tb


def fused_critic_forward(state, action, packed, n_heads,
                         *, batch_tile=_DEFAULT_BATCH_TILE):
    """Run `n_heads` packed critics in one pallas_call. Returns (n_heads, B) f32."""
    w1s, w1a, b1, w2, b2, w3h, b3h = packed
    B, d_s = state.shape
    n_a = action.shape[1]
    fc1t = w1s.shape[1]
    fc2t = w2.shape[1]

    n_tiles, tb, Bp = _tile_plan(B, batch_tile)
    if Bp != B:  # pad batch so every tile is full and every store unmasked
        state = jnp.pad(state, ((0, Bp - B), (0, 0)))
        action = jnp.pad(action, ((0, Bp - B), (0, 0)))

    resident = lambda a: pl.BlockSpec(a.shape, lambda i: (0,) * a.ndim)

    flops = 2 * Bp * ((d_s + n_a) * fc1t + fc1t * fc2t + _HEAD_PAD * fc2t)
    weight_bytes = sum(int(a.size) * a.dtype.itemsize
                       for a in (w1s, w1a, b1, w2, b2, w3h, b3h))
    bytes_accessed = ((int(state.size) + int(action.size)) * 4
                      + weight_bytes + _HEAD_PAD * Bp * 4)
    cost = pl.CostEstimate(flops=int(flops), transcendentals=0,
                           bytes_accessed=int(bytes_accessed))

    q_rows = pl.pallas_call(
        _critic_kernel,
        out_shape=jax.ShapeDtypeStruct((_HEAD_PAD, Bp), jnp.float32),
        grid=(n_tiles,),
        in_specs=[
            pl.BlockSpec((tb, d_s), lambda i: (i, 0)),       # state tile
            pl.BlockSpec((tb, n_a), lambda i: (i, 0)),       # action tile
            resident(w1s), resident(w1a), resident(b1),
            resident(w2), resident(b2),
            resident(w3h), resident(b3h),
        ],
        out_specs=pl.BlockSpec((_HEAD_PAD, tb), lambda i: (0, i)),
        compiler_params=pltpu.CompilerParams(
            dimension_semantics=("parallel",)),
        cost_estimate=cost,
    )(state, action, w1s, w1a, b1, w2, b2, w3h, b3h)

    return q_rows[:n_heads, :B]


def critic_forward(state, action, packed_single, *, batch_tile=_DEFAULT_BATCH_TILE):
    """CriticNetwork.forward(state, action) -> (B, 1). Exact module semantics."""
    q = fused_critic_forward(state, action, packed_single, 1,
                             batch_tile=batch_tile)
    return q[0].reshape(-1, 1)


def dual_critic_forward(state, action, packed_pair,
                        *, batch_tile=_DEFAULT_BATCH_TILE):
    """Both SAC critics fused in one pallas_call -> (q1 (B,1), q2 (B,1))."""
    q = fused_critic_forward(state, action, packed_pair, 2,
                             batch_tile=batch_tile)
    return q[0].reshape(-1, 1), q[1].reshape(-1, 1)


# --------------------------------------------------------------------------
# Parameter helpers
# --------------------------------------------------------------------------
def init_params(key, input_dims, n_actions, fc1_dims, fc2_dims):
    """PyTorch-layout parameters for one CriticNetwork (default Linear init)."""
    d_in = input_dims + n_actions
    k = jax.random.split(key, 6)

    def uni(kk, shape, fan_in):
        b = 1.0 / (fan_in ** 0.5)
        return jax.random.uniform(kk, shape, jnp.float32, -b, b)

    w1 = uni(k[0], (fc1_dims, d_in), d_in)
    b1 = uni(k[1], (fc1_dims,), d_in)
    w2 = uni(k[2], (fc2_dims, fc1_dims), fc1_dims)
    b2 = uni(k[3], (fc2_dims,), fc1_dims)
    w3 = uni(k[4], (1, fc2_dims), fc2_dims)
    b3 = uni(k[5], (1,), fc2_dims)
    return (w1, b1, w2, b2, w3, b3)


def pack_critics(critics, input_dims, weight_dtype=jnp.bfloat16):
    """Pack 1..8 critics (torch-layout params) into the fused kernel layout.

    Kernel layout (n = number of critics):
      w1s : (d_s, n*fc1)   weight_dtype   == concat_c fc1_c.weight[:, :d_s].T
      w1a : (n_a, n*fc1)   weight_dtype   == concat_c fc1_c.weight[:, d_s:].T
      b1  : (1, n*fc1)     f32
      w2  : (n*fc1, n*fc2) weight_dtype   block-diag of fc2_c.weight.T
      b2  : (1, n*fc2)     f32
      w3h : (8, n*fc2)     f32            row c = q1_c.weight in critic c's slot
      b3h : (8, 1)         f32            row c = q1_c.bias
    """
    n = len(critics)
    assert 1 <= n <= _HEAD_PAD
    d_s = input_dims
    fc2 = critics[0][2].shape[0]

    w1s = jnp.concatenate([c[0][:, :d_s].T for c in critics], axis=1)
    w1a = jnp.concatenate([c[0][:, d_s:].T for c in critics], axis=1)
    b1 = jnp.concatenate([c[1] for c in critics])[None, :]
    w2 = _block_diag([c[2].T for c in critics])
    b2 = jnp.concatenate([c[3] for c in critics])[None, :]

    w3h = jnp.zeros((_HEAD_PAD, n * fc2), jnp.float32)
    b3h = jnp.zeros((_HEAD_PAD, 1), jnp.float32)
    for i, c in enumerate(critics):
        w3h = w3h.at[i, i * fc2:(i + 1) * fc2].set(c[4].reshape(fc2))
        b3h = b3h.at[i, 0].set(c[5].reshape(()))

    f32 = jnp.float32
    return (w1s.astype(weight_dtype), w1a.astype(weight_dtype), b1.astype(f32),
            w2.astype(weight_dtype), b2.astype(f32), w3h, b3h)


def reference_forward(state, action, torch_params, weight_dtype=jnp.bfloat16):
    """Plain-JAX reference of CriticNetwork.forward.

    weight_dtype emulates the kernel's MXU input precision (bf16 weights and
    activations, f32 accumulation); pass jnp.float32 for the strict forward.
    """
    w1, b1, w2, b2, w3, b3 = torch_params
    x = jnp.concatenate([state, action], axis=1)
    h1 = jnp.maximum(
        jnp.dot(x.astype(weight_dtype), w1.T.astype(weight_dtype),
                preferred_element_type=jnp.float32) + b1, 0.0)
    h2 = jnp.maximum(
        jnp.dot(h1.astype(weight_dtype), w2.T.astype(weight_dtype),
                preferred_element_type=jnp.float32) + b2, 0.0)
    return jnp.dot(h2, w3.T) + b3


# --------------------------------------------------------------------------
if __name__ == "__main__":
    # Small shapes consistent with the module: input_dims=[16], n_actions=4,
    # fc1_dims=32, fc2_dims=32, batch=8.
    batch, input_dims, n_actions, fc1_dims, fc2_dims = 8, 16, 4, 32, 32

    key = jax.random.PRNGKey(0)
    ks, ka, k1, k2 = jax.random.split(key, 4)
    state = jax.random.normal(ks, (batch, input_dims), jnp.float32)
    action = jax.random.normal(ka, (batch, n_actions), jnp.float32)
    params_q1 = init_params(k1, input_dims, n_actions, fc1_dims, fc2_dims)
    params_q2 = init_params(k2, input_dims, n_actions, fc1_dims, fc2_dims)

    # --- single critic, f32 weights: strict check of the kernel math -------
    packed_f32 = pack_critics([params_q1], input_dims, weight_dtype=jnp.float32)
    q = jax.block_until_ready(critic_forward(state, action, packed_f32))
    q_ref = reference_forward(state, action, params_q1, weight_dtype=jnp.float32)
    assert q.shape == (batch, 1), q.shape
    assert jnp.allclose(q, q_ref, atol=2e-3, rtol=2e-3), (q, q_ref)

    # --- production config: bf16 weights, both SAC critics fused ----------
    packed_pair = pack_critics([params_q1, params_q2], input_dims)  # bf16
    q1, q2 = jax.block_until_ready(dual_critic_forward(state, action, packed_pair))
    r1 = reference_forward(state, action, params_q1)  # bf16-emulated reference
    r2 = reference_forward(state, action, params_q2)
    assert q1.shape == (batch, 1) and q2.shape == (batch, 1)
    assert jnp.allclose(q1, r1, atol=2e-2, rtol=2e-2), (q1, r1)
    assert jnp.allclose(q2, r2, atol=2e-2, rtol=2e-2), (q2, r2)

    print("KERNEL_OK")
</pallas_src>

<mosaic_0001>
module attributes {stable_mosaic.version = 11 : i64} {
  func.func @_critic_kernel(%arg0: i32, %arg1: memref<8x16xf32, #tpu.memory_space<vmem>>, %arg2: memref<8x4xf32, #tpu.memory_space<vmem>>, %arg3: memref<16x32xf32, #tpu.memory_space<vmem>>, %arg4: memref<4x32xf32, #tpu.memory_space<vmem>>, %arg5: memref<1x32xf32, #tpu.memory_space<vmem>>, %arg6: memref<32x32xf32, #tpu.memory_space<vmem>>, %arg7: memref<1x32xf32, #tpu.memory_space<vmem>>, %arg8: memref<8x32xf32, #tpu.memory_space<vmem>>, %arg9: memref<8x1xf32, #tpu.memory_space<vmem>>, %arg10: memref<8x8xf32, #tpu.memory_space<vmem>>) attributes {dimension_semantics = [#tpu.dimension_semantics<parallel>], iteration_bounds = array<i64: 1>, scalar_prefetch = 0 : i64, scratch_operands = 0 : i64, tpu.core_type = #tpu.core_type<tc>, window_params = [{transform_indices = @transform_0, window_bounds = array<i64: 8, 16>}, {transform_indices = @transform_1, window_bounds = array<i64: 8, 4>}, {pipeline_mode = #tpu.pipeline_mode<synchronous>, transform_indices = @transform_2, window_bounds = array<i64: 16, 32>}, {pipeline_mode = #tpu.pipeline_mode<synchronous>, transform_indices = @transform_3, window_bounds = array<i64: 4, 32>}, {pipeline_mode = #tpu.pipeline_mode<synchronous>, transform_indices = @transform_4, window_bounds = array<i64: 1, 32>}, {pipeline_mode = #tpu.pipeline_mode<synchronous>, transform_indices = @transform_5, window_bounds = array<i64: 32, 32>}, {pipeline_mode = #tpu.pipeline_mode<synchronous>, transform_indices = @transform_6, window_bounds = array<i64: 1, 32>}, {pipeline_mode = #tpu.pipeline_mode<synchronous>, transform_indices = @transform_7, window_bounds = array<i64: 8, 32>}, {pipeline_mode = #tpu.pipeline_mode<synchronous>, transform_indices = @transform_8, window_bounds = array<i64: 8, 1>}, {transform_indices = @transform_9, window_bounds = array<i64: 8, 8>}]} {
    %c0 = arith.constant 0 : index
    %c0_0 = arith.constant 0 : index
    %0 = vector.load %arg1[%c0, %c0_0] : memref<8x16xf32, #tpu.memory_space<vmem>>, vector<8x16xf32>
    %c0_1 = arith.constant 0 : index
    %c0_2 = arith.constant 0 : index
    %1 = vector.load %arg3[%c0_1, %c0_2] : memref<16x32xf32, #tpu.memory_space<vmem>>, vector<16x32xf32>
    %cst = arith.constant dense<0.000000e+00> : vector<8x32xf32>
    %2 = tpu.matmul %0, %1, %cst {dimension_numbers = #tpu.dot_dimension_numbers<[1], [0], [0], [1], [0, 0, 1, 1], [], []>} : vector<8x16xf32>, vector<16x32xf32>, vector<8x32xf32> -> vector<8x32xf32>
    %c0_3 = arith.constant 0 : index
    %c0_4 = arith.constant 0 : index
    %3 = vector.load %arg2[%c0_3, %c0_4] : memref<8x4xf32, #tpu.memory_space<vmem>>, vector<8x4xf32>
    %c0_5 = arith.constant 0 : index
    %c0_6 = arith.constant 0 : index
    %4 = vector.load %arg4[%c0_5, %c0_6] : memref<4x32xf32, #tpu.memory_space<vmem>>, vector<4x32xf32>
    %cst_7 = arith.constant dense<0.000000e+00> : vector<8x32xf32>
    %5 = tpu.matmul %3, %4, %cst_7 {dimension_numbers = #tpu.dot_dimension_numbers<[1], [0], [0], [1], [0, 0, 1, 1], [], []>} : vector<8x4xf32>, vector<4x32xf32>, vector<8x32xf32> -> vector<8x32xf32>
    %6 = arith.addf %2, %5 : vector<8x32xf32>
    %c0_8 = arith.constant 0 : index
    %c0_9 = arith.constant 0 : index
    %7 = vector.load %arg5[%c0_8, %c0_9] : memref<1x32xf32, #tpu.memory_space<vmem>>, vector<1x32xf32>
    %8 = vector.broadcast %7 : vector<1x32xf32> to vector<8x32xf32>
    %9 = arith.addf %6, %8 : vector<8x32xf32>
    %cst_10 = arith.constant 0.000000e+00 : f32
    %10 = vector.broadcast %cst_10 : f32 to vector<8x32xf32>
    %11 = arith.maximumf %9, %10 : vector<8x32xf32>
    %c0_11 = arith.constant 0 : index
    %c0_12 = arith.constant 0 : index
    %12 = vector.load %arg6[%c0_11, %c0_12] : memref<32x32xf32, #tpu.memory_space<vmem>>, vector<32x32xf32>
    %cst_13 = arith.constant dense<0.000000e+00> : vector<8x32xf32>
    %13 = tpu.matmul %11, %12, %cst_13 {dimension_numbers = #tpu.dot_dimension_numbers<[1], [0], [0], [1], [0, 0, 1, 1], [], []>} : vector<8x32xf32>, vector<32x32xf32>, vector<8x32xf32> -> vector<8x32xf32>
    %c0_14 = arith.constant 0 : index
    %c0_15 = arith.constant 0 : index
    %14 = vector.load %arg7[%c0_14, %c0_15] : memref<1x32xf32, #tpu.memory_space<vmem>>, vector<1x32xf32>
    %15 = vector.broadcast %14 : vector<1x32xf32> to vector<8x32xf32>
    %16 = arith.addf %13, %15 : vector<8x32xf32>
    %cst_16 = arith.constant 0.000000e+00 : f32
    %17 = vector.broadcast %cst_16 : f32 to vector<8x32xf32>
    %18 = arith.maximumf %16, %17 : vector<8x32xf32>
    %c0_17 = arith.constant 0 : index
    %c0_18 = arith.constant 0 : index
    %19 = vector.load %arg8[%c0_17, %c0_18] : memref<8x32xf32, #tpu.memory_space<vmem>>, vector<8x32xf32>
    %cst_19 = arith.constant dense<0.000000e+00> : vector<8x8xf32>
    %20 = tpu.matmul %19, %18, %cst_19 {dimension_numbers = #tpu.dot_dimension_numbers<[1], [1], [0], [0], [0, 0, 1, 0], [], []>} : vector<8x32xf32>, vector<8x32xf32>, vector<8x8xf32> -> vector<8x8xf32>
    %c0_20 = arith.constant 0 : index
    %c0_21 = arith.constant 0 : index
    %21 = vector.load %arg9[%c0_20, %c0_21] : memref<8x1xf32, #tpu.memory_space<vmem>>, vector<8x1xf32>
    %22 = vector.broadcast %21 : vector<8x1xf32> to vector<8x8xf32>
    %23 = arith.addf %20, %22 : vector<8x8xf32>
    %c0_22 = arith.constant 0 : index
    %c0_23 = arith.constant 0 : index
    %24 = vector.load %arg10[%c0_22, %c0_23] : memref<8x8xf32, #tpu.memory_space<vmem>>, vector<8x8xf32>
    tpu.vector_store %arg10[%c0_22, %c0_23], %23 {strides = array<i32>} : memref<8x8xf32, #tpu.memory_space<vmem>>, vector<8x8xf32>,
    return
  }
  func.func @transform_0(%arg0: i32) -> (i32, i32) {
    %c0_i32 = arith.constant 0 : i32
    %c0_i32_0 = arith.constant 0 : i32
    return %arg0, %c0_i32 : i32, i32
  }
  func.func @transform_1(%arg0: i32) -> (i32, i32) {
    %c0_i32 = arith.constant 0 : i32
    %c0_i32_0 = arith.constant 0 : i32
    return %arg0, %c0_i32 : i32, i32
  }
  func.func @transform_2(%arg0: i32) -> (i32, i32) {
    %c0_i32 = arith.constant 0 : i32
    %c0_i32_0 = arith.constant 0 : i32
    %c0_i32_1 = arith.constant 0 : i32
    return %c0_i32, %c0_i32_0 : i32, i32
  }
  func.func @transform_3(%arg0: i32) -> (i32, i32) {
    %c0_i32 = arith.constant 0 : i32
    %c0_i32_0 = arith.constant 0 : i32
    %c0_i32_1 = arith.constant 0 : i32
    return %c0_i32, %c0_i32_0 : i32, i32
  }
  func.func @transform_4(%arg0: i32) -> (i32, i32) {
    %c0_i32 = arith.constant 0 : i32
    %c0_i32_0 = arith.constant 0 : i32
    %c0_i32_1 = arith.constant 0 : i32
    return %c0_i32, %c0_i32_0 : i32, i32
  }
  func.func @transform_5(%arg0: i32) -> (i32, i32) {
    %c0_i32 = arith.constant 0 : i32
    %c0_i32_0 = arith.constant 0 : i32
    %c0_i32_1 = arith.constant 0 : i32
    return %c0_i32, %c0_i32_0 : i32, i32
  }
  func.func @transform_6(%arg0: i32) -> (i32, i32) {
    %c0_i32 = arith.constant 0 : i32
    %c0_i32_0 = arith.constant 0 : i32
    %c0_i32_1 = arith.constant 0 : i32
    return %c0_i32, %c0_i32_0 : i32, i32
  }
  func.func @transform_7(%arg0: i32) -> (i32, i32) {
    %c0_i32 = arith.constant 0 : i32
    %c0_i32_0 = arith.constant 0 : i32
    %c0_i32_1 = arith.constant 0 : i32
    return %c0_i32, %c0_i32_0 : i32, i32
  }
  func.func @transform_8(%arg0: i32) -> (i32, i32) {
    %c0_i32 = arith.constant 0 : i32
    %c0_i32_0 = arith.constant 0 : i32
    %c0_i32_1 = arith.constant 0 : i32
    return %c0_i32, %c0_i32_0 : i32, i32
  }
  func.func @transform_9(%arg0: i32) -> (i32, i32) {
    %c0_i32 = arith.constant 0 : i32
    %c0_i32_0 = arith.constant 0 : i32
    return %c0_i32, %arg0 : i32, i32
  }
}

</mosaic_0001>

<llo_original>
// kernel: tpu_custom_call.1
$region0: #{tpu_custom_call.1}
  #allocation0 [shape = 'u32[]', space=smem, size = 0x4, offset = 0x4, fixed_abs, tag = 'smem constant byte address 0x4 - core index']
  #allocation1 [shape = 'u32[144,128]{1,0:T(1,128)}', space=vmem, size = 0x12000, scoped, tag = 'internal scratch']
  %s0 = inlined_call_operand.hbm [shape: f32[8,16], index: 0, kind: input, shape index: {}]
  %s1 = inlined_call_operand.vmem [shape: f32[8,4], index: 1, kind: input, shape index: {}]
  %s2 = inlined_call_operand.hbm [shape: f32[16,32], index: 2, kind: input, shape index: {}]
  %s3 = inlined_call_operand.hbm [shape: f32[4,32], index: 3, kind: input, shape index: {}]
  %s4 = inlined_call_operand.vmem [shape: f32[1,32], index: 4, kind: input, shape index: {}]
  %s5 = inlined_call_operand.vmem [shape: f32[32,32], index: 5, kind: input, shape index: {}]
  %s6 = inlined_call_operand.vmem [shape: f32[1,32], index: 6, kind: input, shape index: {}]
  %s7 = inlined_call_operand.vmem [shape: f32[8,32], index: 7, kind: input, shape index: {}]
  %s8 = inlined_call_operand.vmem [shape: f32[8,1], index: 8, kind: input, shape index: {}]
  %s9 = inlined_call_operand.hbm [shape: f32[8,8], index: 9, kind: output, shape index: {}]
  %s10 = sld [smem:[#allocation0]]
  $region58: #{tpu_custom_call.1} parent=0
    _
  %s12 = ssub.s32 1, %s10
  %s13 = scalar_select 0, %s12, %s10
  $region1: #{tpu_custom_call.1} parent=0
    #allocation2 [shape = 'u8[4096]{0}', space=vmem, size = 0x1000, scoped, tag = 'input window, operand 0, single buffered']
    #allocation3 [shape = 's32[1]{0}', space=sflag, size = 0x4, scoped, tag = 'scoped memory for tpu_custom_call.1']
    #allocation4 [shape = 's32[1]{0}', space=sflag, size = 0x4, scoped, tag = 'scoped memory for tpu_custom_call.1']
    #allocation5 [shape = 'u8[8192]{0}', space=vmem, size = 0x2000, scoped, tag = 'input window, operand 2, single buffered']
    #allocation6 [shape = 's32[1]{0}', space=sflag, size = 0x4, scoped, tag = 'scoped memory for tpu_custom_call.1']
    #allocation7 [shape = 'u8[2048]{0}', space=vmem, size = 0x800, scoped, tag = 'input window, operand 3, single buffered']
    #allocation8 [shape = 'u8[4096]{0}', space=vmem, size = 0x1000, scoped, tag = 'output window, operand 0, single buffered']
    %14 = vsyncpa [#allocation3], 0
    %15 = vsyncpa [#allocation6], 0
    %16 = vsyncpa [#allocation4], 0
    // Predicated region
    $region2: #{tpu_custom_call.1} parent=1 // pred_check
      _
    $region3: #{tpu_custom_call.1} parent=1 // pred_check_branch
      %18 = sbr.rel (0) target = $region5
    $region4: #{tpu_custom_call.1} parent=1 // pred_region
      %s20 = ssub.s32 128, 128
      %21 = vsyncadd [#allocation3], %s20
      %s23 = sshll.u32 [#allocation2], 4
      %s24 = int_to_ptr.vmem [resolvable:$true] %s23
      %26 = dma.hbm_to_vmem [thread:$0]  %s0, 128, %s24, [#allocation3]
    $region5: #{tpu_custom_call.1} parent=1 // pred_fallthru
      _
    // Predicated region
    $region6: #{tpu_custom_call.1} parent=1 // pred_check
      _
    $region7: #{tpu_custom_call.1} parent=1 // pred_check_branch
      %28 = sbr.rel (0) target = $region9
    $region8: #{tpu_custom_call.1} parent=1 // pred_region
      _
    $region9: #{tpu_custom_call.1} parent=1 // pred_fallthru
      _
    // Predicated region
    $region10: #{tpu_custom_call.1} parent=1 // pred_check
      _
    $region11: #{tpu_custom_call.1} parent=1 // pred_check_branch
      %30 = sbr.rel (0) target = $region13
    $region12: #{tpu_custom_call.1} parent=1 // pred_region
      %s32 = ssub.s32 256, 256
      %33 = vsyncadd [#allocation6], %s32
      %s34 = sshll.u32 [#allocation5], 4
      %s35 = int_to_ptr.vmem [resolvable:$true] %s34
      %40 = dma.hbm_to_vmem [thread:$0]  %s2, 256, %s35, [#allocation6], 128, 128, 8
    $region13: #{tpu_custom_call.1} parent=1 // pred_fallthru
      _
    // Predicated region
    $region14: #{tpu_custom_call.1} parent=1 // pred_check
      _
    $region15: #{tpu_custom_call.1} parent=1 // pred_check_branch
      %42 = sbr.rel (0) target = $region17
    $region16: #{tpu_custom_call.1} parent=1 // pred_region
      %s44 = ssub.s32 64, 64
      %45 = vsyncadd [#allocation6], %s44
      %s47 = sshll.u32 [#allocation7], 4
      %s48 = int_to_ptr.vmem [resolvable:$true] %s47
      %50 = dma.hbm_to_vmem [thread:$0]  %s3, 64, %s48, [#allocation6]
    $region17: #{tpu_custom_call.1} parent=1 // pred_fallthru
      _
    // Predicated region
    $region18: #{tpu_custom_call.1} parent=1 // pred_check
      _
    $region19: #{tpu_custom_call.1} parent=1 // pred_check_branch
      %52 = sbr.rel (0) target = $region21
    $region20: #{tpu_custom_call.1} parent=1 // pred_region
      _
    $region21: #{tpu_custom_call.1} parent=1 // pred_fallthru
      _
    // Predicated region
    $region22: #{tpu_custom_call.1} parent=1 // pred_check
      _
    $region23: #{tpu_custom_call.1} parent=1 // pred_check_branch
      %54 = sbr.rel (0) target = $region25
    $region24: #{tpu_custom_call.1} parent=1 // pred_region
      _
    $region25: #{tpu_custom_call.1} parent=1 // pred_fallthru
      _
    // Predicated region
    $region26: #{tpu_custom_call.1} parent=1 // pred_check
      _
    $region27: #{tpu_custom_call.1} parent=1 // pred_check_branch
      %56 = sbr.rel (0) target = $region29
    $region28: #{tpu_custom_call.1} parent=1 // pred_region
      _
    $region29: #{tpu_custom_call.1} parent=1 // pred_fallthru
      _
    // Predicated region
    $region30: #{tpu_custom_call.1} parent=1 // pred_check
      _
    $region31: #{tpu_custom_call.1} parent=1 // pred_check_branch
      %58 = sbr.rel (0) target = $region33
    $region32: #{tpu_custom_call.1} parent=1 // pred_region
      _
    $region33: #{tpu_custom_call.1} parent=1 // pred_fallthru
      _
    // Predicated region
    $region34: #{tpu_custom_call.1} parent=1 // pred_check
      _
    $region35: #{tpu_custom_call.1} parent=1 // pred_check_branch
      %60 = sbr.rel (0) target = $region37
    $region36: #{tpu_custom_call.1} parent=1 // pred_region
      _
    $region37: #{tpu_custom_call.1} parent=1 // pred_fallthru
      _
    // Predicated region
    $region38: #{tpu_custom_call.1} parent=1 // pred_check
      _
    $region39: #{tpu_custom_call.1} parent=1 // pred_check_branch
      %62 = sbr.rel (0) target = $region41
    $region40: #{tpu_custom_call.1} parent=1 // pred_region
      %63 = dma.done [#allocation3], 128
    $region41: #{tpu_custom_call.1} parent=1 // pred_fallthru
      _
    // Predicated region
    $region42: #{tpu_custom_call.1} parent=1 // pred_check
      _
    $region43: #{tpu_custom_call.1} parent=1 // pred_check_branch
      %65 = sbr.rel (0) target = $region45
    $region44: #{tpu_custom_call.1} parent=1 // pred_region
      %66 = dma.done [#allocation6], 256
    $region45: #{tpu_custom_call.1} parent=1 // pred_fallthru
      _
    // Predicated region
    $region46: #{tpu_custom_call.1} parent=1 // pred_check
      _
    $region47: #{tpu_custom_call.1} parent=1 // pred_check_branch
      %68 = sbr.rel (0) target = $region49
    $region48: #{tpu_custom_call.1} parent=1 // pred_region
      %69 = dma.done [#allocation6], 64
    $region49: #{tpu_custom_call.1} parent=1 // pred_fallthru
      _
    %v70 = vld [vmem:[#allocation2] sm:$0xff]
    %v71 = vld [vmem:[#allocation5] sm:$0xff]
    %v72 = vld [vmem:[#allocation5 + $0x8] sm:$0xff]
    %v73 = vld [vmem:[%s1] sm:$0xff]
    %v74 = vld [vmem:[#allocation7] sm:$0xf]
    %vm75 = vcmask 31744
    %v77 = vsel %vm75, %v73, 0
    %vm79 = vcmask 1043456
    %v81 = vsel %vm79, %v74, 0
    %83 = vmatprep.subr.mxu0 0.0
    %84 = vmatpush1.msra.mxu0 %v81
    %85 = vmatprep.subr.mxu0 0.0
    %86 = vmatpush1.msra.mxu0 0.0
    %87 = vmatprep.subr.mxu0 0.0
    %88 = vmatpush1.msra.mxu0 0.0
    %89 = vmatprep.subr.mxu0 0.0
    %90 = vmatpush1.msra.mxu0 0.0
    %91 = vmatprep.subr.mxu0 0.0
    %92 = vmatpush1.msra.mxu0 0.0
    %93 = vmatprep.subr.mxu0 0.0
    %94 = vmatpush1.msra.mxu0 0.0
    %95 = vmatprep.subr.mxu0 0.0
    %96 = vmatpush1.msra.mxu0 0.0
    %97 = vmatprep.subr.mxu0 0.0
    %98 = vmatpush1.msra.mxu0 0.0
    %99 = vmatprep.subr.mxu0 0.0
    %100 = vmatpush1.msra.mxu0 0.0
    %101 = vmatprep.subr.mxu0 0.0
    %102 = vmatpush1.msra.mxu0 0.0
    %103 = vmatprep.subr.mxu0 0.0
    %104 = vmatpush1.msra.mxu0 0.0
    %105 = vmatprep.subr.mxu0 0.0
    %106 = vmatpush1.msra.mxu0 0.0
    %107 = vmatprep.subr.mxu0 0.0
    %108 = vmatpush1.msra.mxu0 0.0
    %109 = vmatprep.subr.mxu0 0.0
    %110 = vmatpush1.msra.mxu0 0.0
    %111 = vmatprep.subr.mxu0 0.0
    %112 = vmatpush1.msra.mxu0 0.0
    %113 = vmatprep.subr.mxu0 0.0
    %114 = vmatpush1.msra.mxu0 0.0
    %115 = vmatprep.subr.mxu0 0.0
    %116 = vmatpush1.msra.mxu0 0.0
    %117 = vmatprep.subr.mxu0 0.0
    %118 = vmatpush1.msra.mxu0 0.0
    %119 = vmatprep.subr.mxu0 0.0
    %120 = vmatpush1.msra.mxu0 0.0
    %121 = vmatprep.subr.mxu0 0.0
    %122 = vmatpush1.msra.mxu0 0.0
    %123 = vmatprep.subr.mxu0 0.0
    %124 = vmatpush1.msra.mxu0 0.0
    %125 = vmatprep.subr.mxu0 0.0
    %126 = vmatpush1.msra.mxu0 0.0
    %127 = vmatprep.subr.mxu0 0.0
    %128 = vmatpush1.msra.mxu0 0.0
    %129 = vmatprep.subr.mxu0 0.0
    %130 = vmatpush1.msra.mxu0 0.0
    %131 = vmatprep.subr.mxu0 0.0
    %132 = vmatpush1.msra.mxu0 0.0
    %133 = vmatprep.subr.mxu0 0.0
    %134 = vmatpush1.msra.mxu0 0.0
    %135 = vmatprep.subr.mxu0 0.0
    %136 = vmatpush1.msra.mxu0 0.0
    %137 = vmatprep.subr.mxu0 0.0
    %138 = vmatpush1.msra.mxu0 0.0
    %139 = vmatprep.subr.mxu0 0.0
    %140 = vmatpush1.msra.mxu0 0.0
    %141 = vmatprep.subr.mxu0 0.0
    %142 = vmatpush1.msra.mxu0 0.0
    %143 = vmatprep.subr.mxu0 0.0
    %144 = vmatpush1.msra.mxu0 0.0
    %145 = vmatprep.subr.mxu0 0.0
    %146 = vmatpush1.msra.mxu0 0.0
    %147 = vmatprep.mubr.f32.mxu0 0.0
    %148 = vmatmul.mubr.f32.gmra.mrb[0].mxu0 %v77
    %v149 = vpop.f32.mrb[0].mxu0
    %v150 = vadd.f32 0.0, %v149
    %v151 = vpop.f32.mrb[0].mxu0
    %152 = vdwg.mxu0
    %vm153 = vcmask 130048
    %v155 = vsel %vm153, %v70, 0
    %157 = vmatprep.subr.mxu0 0.0
    %158 = vmatpush1.msra.mxu0 %v71
    %159 = vmatprep.subr.mxu0 0.0
    %160 = vmatpush1.msra.mxu0 %v72
    %161 = vmatprep.subr.mxu0 0.0
    %162 = vmatpush1.msra.mxu0 0.0
    %163 = vmatprep.subr.mxu0 0.0
    %164 = vmatpush1.msra.mxu0 0.0
    %165 = vmatprep.subr.mxu0 0.0
    %166 = vmatpush1.msra.mxu0 0.0
    %167 = vmatprep.subr.mxu0 0.0
    %168 = vmatpush1.msra.mxu0 0.0
    %169 = vmatprep.subr.mxu0 0.0
    %170 = vmatpush1.msra.mxu0 0.0
    %171 = vmatprep.subr.mxu0 0.0
    %172 = vmatpush1.msra.mxu0 0.0
    %173 = vmatprep.subr.mxu0 0.0
    %174 = vmatpush1.msra.mxu0 0.0
    %175 = vmatprep.subr.mxu0 0.0
    %176 = vmatpush1.msra.mxu0 0.0
    %177 = vmatprep.subr.mxu0 0.0
    %178 = vmatpush1.msra.mxu0 0.0
    %179 = vmatprep.subr.mxu0 0.0
    %180 = vmatpush1.msra.mxu0 0.0
    %181 = vmatprep.subr.mxu0 0.0
    %182 = vmatpush1.msra.mxu0 0.0
    %183 = vmatprep.subr.mxu0 0.0
    %184 = vmatpush1.msra.mxu0 0.0
    %185 = vmatprep.subr.mxu0 0.0
    %186 = vmatpush1.msra.mxu0 0.0
    %187 = vmatprep.subr.mxu0 0.0
    %188 = vmatpush1.msra.mxu0 0.0
    %189 = vmatprep.subr.mxu0 0.0
    %190 = vmatpush1.msra.mxu0 0.0
    %191 = vmatprep.subr.mxu0 0.0
    %192 = vmatpush1.msra.mxu0 0.0
    %193 = vmatprep.subr.mxu0 0.0
    %194 = vmatpush1.msra.mxu0 0.0
    %195 = vmatprep.subr.mxu0 0.0
    %196 = vmatpush1.msra.mxu0 0.0
    %197 = vmatprep.subr.mxu0 0.0
    %198 = vmatpush1.msra.mxu0 0.0
    %199 = vmatprep.subr.mxu0 0.0
    %200 = vmatpush1.msra.mxu0 0.0
    %201 = vmatprep.subr.mxu0 0.0
    %202 = vmatpush1.msra.mxu0 0.0
    %203 = vmatprep.subr.mxu0 0.0
    %204 = vmatpush1.msra.mxu0 0.0
    %205 = vmatprep.subr.mxu0 0.0
    %206 = vmatpush1.msra.mxu0 0.0
    %207 = vmatprep.subr.mxu0 0.0
    %208 = vmatpush1.msra.mxu0 0.0
    %209 = vmatprep.subr.mxu0 0.0
    %210 = vmatpush1.msra.mxu0 0.0
    %211 = vmatprep.subr.mxu0 0.0
    %212 = vmatpush1.msra.mxu0 0.0
    %213 = vmatprep.subr.mxu0 0.0
    %214 = vmatpush1.msra.mxu0 0.0
    %215 = vmatprep.subr.mxu0 0.0
    %216 = vmatpush1.msra.mxu0 0.0
    %217 = vmatprep.subr.mxu0 0.0
    %218 = vmatpush1.msra.mxu0 0.0
    %219 = vmatprep.subr.mxu0 0.0
    %220 = vmatpush1.msra.mxu0 0.0
    %221 = vmatprep.mubr.f32.mxu0 0.0
    %222 = vmatmul.mubr.f32.gmra.mrb[0].mxu0 %v155
    %v223 = vpop.f32.mrb[0].mxu0
    %v224 = vadd.f32 %v150, %v223
    %v225 = vpop.f32.mrb[0].mxu0
    %226 = vdwg.mxu0
    %v227 = vld [vmem:[%s4] sm:$0x1]
    %v229 = vlaneseq
    %v230 = vshrl.u32 %v229, 7
    %v231 = vsub.s32 0, %v230
    %v232 = vrot.slane %v227, %v231
    %v234 = vadd.f32 %v224, %v232
    %v235 = vmax.f32 %v234, 0.0
    %v236 = vld [vmem:[%s5] sm:$0xff]
    %v237 = vld [vmem:[%s5 + $0x8] sm:$0xff]
    %v238 = vld [vmem:[%s5 + $0x10] sm:$0xff]
    %v239 = vld [vmem:[%s5 + $0x18] sm:$0xff]
    %v240 = vld [vmem:[%s6] sm:$0x1]
    %v242 = vlaneseq
    %v243 = vshrl.u32 %v242, 7
    %v244 = vsub.s32 0, %v243
    %v245 = vrot.slane %v240, %v244
    %vm247 = vcmask 261120
    %v249 = vsel %vm247, %v235, 0
    %251 = vmatprep.subr.mxu0 0.0
    %252 = vmatpush1.msra.mxu0 %v236
    %253 = vmatprep.subr.mxu0 0.0
    %254 = vmatpush1.msra.mxu0 %v237
    %255 = vmatprep.subr.mxu0 0.0
    %256 = vmatpush1.msra.mxu0 %v238
    %257 = vmatprep.subr.mxu0 0.0
    %258 = vmatpush1.msra.mxu0 %v239
    %259 = vmatprep.subr.mxu0 0.0
    %260 = vmatpush1.msra.mxu0 0.0
    %261 = vmatprep.subr.mxu0 0.0
    %262 = vmatpush1.msra.mxu0 0.0
    %263 = vmatprep.subr.mxu0 0.0
    %264 = vmatpush1.msra.mxu0 0.0
    %265 = vmatprep.subr.mxu0 0.0
    %266 = vmatpush1.msra.mxu0 0.0
    %267 = vmatprep.subr.mxu0 0.0
    %268 = vmatpush1.msra.mxu0 0.0
    %269 = vmatprep.subr.mxu0 0.0
    %270 = vmatpush1.msra.mxu0 0.0
    %271 = vmatprep.subr.mxu0 0.0
    %272 = vmatpush1.msra.mxu0 0.0
    %273 = vmatprep.subr.mxu0 0.0
    %274 = vmatpush1.msra.mxu0 0.0
    %275 = vmatprep.subr.mxu0 0.0
    %276 = vmatpush1.msra.mxu0 0.0
    %277 = vmatprep.subr.mxu0 0.0
    %278 = vmatpush1.msra.mxu0 0.0
    %279 = vmatprep.subr.mxu0 0.0
    %280 = vmatpush1.msra.mxu0 0.0
    %281 = vmatprep.subr.mxu0 0.0
    %282 = vmatpush1.msra.mxu0 0.0
    %283 = vmatprep.subr.mxu0 0.0
    %284 = vmatpush1.msra.mxu0 0.0
    %285 = vmatprep.subr.mxu0 0.0
    %286 = vmatpush1.msra.mxu0 0.0
    %287 = vmatprep.subr.mxu0 0.0
    %288 = vmatpush1.msra.mxu0 0.0
    %289 = vmatprep.subr.mxu0 0.0
    %290 = vmatpush1.msra.mxu0 0.0
    %291 = vmatprep.subr.mxu0 0.0
    %292 = vmatpush1.msra.mxu0 0.0
    %293 = vmatprep.subr.mxu0 0.0
    %294 = vmatpush1.msra.mxu0 0.0
    %295 = vmatprep.subr.mxu0 0.0
    %296 = vmatpush1.msra.mxu0 0.0
    %297 = vmatprep.subr.mxu0 0.0
    %298 = vmatpush1.msra.mxu0 0.0
    %299 = vmatprep.subr.mxu0 0.0
    %300 = vmatpush1.msra.mxu0 0.0
    %301 = vmatprep.subr.mxu0 0.0
    %302 = vmatpush1.msra.mxu0 0.0
    %303 = vmatprep.subr.mxu0 0.0
    %304 = vmatpush1.msra.mxu0 0.0
    %305 = vmatprep.subr.mxu0 0.0
    %306 = vmatpush1.msra.mxu0 0.0
    %307 = vmatprep.subr.mxu0 0.0
    %308 = vmatpush1.msra.mxu0 0.0
    %309 = vmatprep.subr.mxu0 0.0
    %310 = vmatpush1.msra.mxu0 0.0
    %311 = vmatprep.subr.mxu0 0.0
    %312 = vmatpush1.msra.mxu0 0.0
    %313 = vmatprep.subr.mxu0 0.0
    %314 = vmatpush1.msra.mxu0 0.0
    %315 = vmatprep.mubr.f32.mxu0 0.0
    %316 = vmatmul.mubr.f32.gmra.mrb[0].mxu0 %v249
    %v317 = vpop.f32.mrb[0].mxu0
    %v318 = vadd.f32 %v245, %v317
    %v319 = vpop.f32.mrb[0].mxu0
    %320 = vdwg.mxu0
    %v321 = vmax.f32 %v318, 0.0
    %v322 = vld [vmem:[%s7] sm:$0xff]
    %v323 = vld [vmem:[%s8] sm:$0xff]
    %325 = vset.pattern.permute.xlu0 0
    %326 = vperm.xlu0 %325, %v323
    %v327 = vpop.permute.xlu0 %326
    %v330 = vsel %vm247, %v322, 0
    %v333 = vsel %vm247, %v321, 0
    %335 = vmatprep.subr.mxu0 0.0
    %336 = vmatpush1.xpose.msra.mxu0 %v333
    %337 = vmatprep.subr.mxu0 0.0
    %338 = vmatpush1.xpose.msra.mxu0 0.0
    %339 = vmatprep.subr.mxu0 0.0
    %340 = vmatpush1.xpose.msra.mxu0 0.0
    %341 = vmatprep.subr.mxu0 0.0
    %342 = vmatpush1.xpose.msra.mxu0 0.0
    %343 = vmatprep.subr.mxu0 0.0
    %344 = vmatpush1.xpose.msra.mxu0 0.0
    %345 = vmatprep.subr.mxu0 0.0
    %346 = vmatpush1.xpose.msra.mxu0 0.0
    %347 = vmatprep.subr.mxu0 0.0
    %348 = vmatpush1.xpose.msra.mxu0 0.0
    %349 = vmatprep.subr.mxu0 0.0
    %350 = vmatpush1.xpose.msra.mxu0 0.0
    %351 = vmatprep.subr.mxu0 0.0
    %352 = vmatpush1.xpose.msra.mxu0 0.0
    %353 = vmatprep.subr.mxu0 0.0
    %354 = vmatpush1.xpose.msra.mxu0 0.0
    %355 = vmatprep.subr.mxu0 0.0
    %356 = vmatpush1.xpose.msra.mxu0 0.0
    %357 = vmatprep.subr.mxu0 0.0
    %358 = vmatpush1.xpose.msra.mxu0 0.0
    %359 = vmatprep.subr.mxu0 0.0
    %360 = vmatpush1.xpose.msra.mxu0 0.0
    %361 = vmatprep.subr.mxu0 0.0
    %362 = vmatpush1.xpose.msra.mxu0 0.0
    %363 = vmatprep.subr.mxu0 0.0
    %364 = vmatpush1.xpose.msra.mxu0 0.0
    %365 = vmatprep.subr.mxu0 0.0
    %366 = vmatpush1.xpose.msra.mxu0 0.0
    %367 = vmatprep.subr.mxu0 0.0
    %368 = vmatpush1.xpose.msra.mxu0 0.0
    %369 = vmatprep.subr.mxu0 0.0
    %370 = vmatpush1.xpose.msra.mxu0 0.0
    %371 = vmatprep.subr.mxu0 0.0
    %372 = vmatpush1.xpose.msra.mxu0 0.0
    %373 = vmatprep.subr.mxu0 0.0
    %374 = vmatpush1.xpose.msra.mxu0 0.0
    %375 = vmatprep.subr.mxu0 0.0
    %376 = vmatpush1.xpose.msra.mxu0 0.0
    %377 = vmatprep.subr.mxu0 0.0
    %378 = vmatpush1.xpose.msra.mxu0 0.0
    %379 = vmatprep.subr.mxu0 0.0
    %380 = vmatpush1.xpose.msra.mxu0 0.0
    %381 = vmatprep.subr.mxu0 0.0
    %382 = vmatpush1.xpose.msra.mxu0 0.0
    %383 = vmatprep.subr.mxu0 0.0
    %384 = vmatpush1.xpose.msra.mxu0 0.0
    %385 = vmatprep.subr.mxu0 0.0
    %386 = vmatpush1.xpose.msra.mxu0 0.0
    %387 = vmatprep.subr.mxu0 0.0
    %388 = vmatpush1.xpose.msra.mxu0 0.0
    %389 = vmatprep.subr.mxu0 0.0
    %390 = vmatpush1.xpose.msra.mxu0 0.0
    %391 = vmatprep.subr.mxu0 0.0
    %392 = vmatpush1.xpose.msra.mxu0 0.0
    %393 = vmatprep.subr.mxu0 0.0
    %394 = vmatpush1.xpose.msra.mxu0 0.0
    %395 = vmatprep.subr.mxu0 0.0
    %396 = vmatpush1.xpose.msra.mxu0 0.0
    %397 = vmatprep.subr.mxu0 0.0
    %398 = vmatpush1.xpose.msra.mxu0 0.0
    %399 = vmatprep.mubr.f32.mxu0 0.0
    %400 = vmatmul.mubr.f32.gmra.mrb[0].mxu0 %v330
    %v401 = vpop.f32.mrb[0].mxu0
    %v402 = vadd.f32 %v327, %v401
    %v403 = vpop.f32.mrb[0].mxu0
    %404 = vdwg.mxu0
    %vm405 = vcmask 64512
    %406 = vst.msk [vmem:[#allocation8] sm:$0xff] %vm405, %v402
    // Predicated region
    $region50: #{tpu_custom_call.1} parent=1 // pred_check
      _
    $region51: #{tpu_custom_call.1} parent=1 // pred_check_branch
      %408 = sbr.rel (0) target = $region53
    $region52: #{tpu_custom_call.1} parent=1 // pred_region
      %s410 = ssub.s32 128, 128
      %411 = vsyncadd [#allocation4], %s410
      %s413 = sshll.u32 [#allocation8], 4
      %s414 = int_to_ptr.vmem [resolvable:$true] %s413
      %416 = dma.vmem_to_hbm [thread:$0]  %s414, 128, %s9, [#allocation4]
    $region53: #{tpu_custom_call.1} parent=1 // pred_fallthru
      _
    // Predicated region
    $region54: #{tpu_custom_call.1} parent=1 // pred_check
      _
    $region55: #{tpu_custom_call.1} parent=1 // pred_check_branch
      %418 = sbr.rel (0) target = $region57
    $region56: #{tpu_custom_call.1} parent=1 // pred_region
      %419 = dma.done [#allocation4], 128
    $region57: #{tpu_custom_call.1} parent=1 // pred_fallthru
      _
    %420 = vsyncpa [#allocation3], 1
    %421 = vsyncpa [#allocation6], 1
    %422 = vsyncpa [#allocation4], 1

</llo_original>
